<compile_context>
chip_gen: v5e
topology: v5e:2x2
jax: 0.10.0
libtpu: 0.0.40
codegen_flags: <defaults>
</compile_context>

<pallas_src>
import functools

import jax
import jax.numpy as jnp
import numpy as np
from jax.experimental import pallas as pl
from jax.experimental.pallas import tpu as pltpu

NUM_BOND_TYPE = 4 + 1 + 1       # 6
NUM_BOND_DIRECTION = 3

LANE = 128
SUBLANE = 16                    # bf16-safe sublane multiple


def _round_up(x, m):
    return ((x + m - 1) // m) * m


def _pad2(a, rows, cols):
    return jnp.pad(a, ((0, rows - a.shape[0]), (0, cols - a.shape[1])))


@functools.lru_cache(maxsize=1)
def _vmem_limit_bytes():
    """Generation-aware VMEM budget: ~3/4 of physical VMEM, capped at 96 MiB."""
    cap = 64 * 1024 * 1024                              # conservative fallback (v7x)
    try:
        info = pltpu.get_tpu_info()
        cap = int(getattr(info, "vmem_capacity_bytes", cap))
    except Exception:
        pass
    return max(min(cap * 3 // 4, 96 * 1024 * 1024), 32 * 1024 * 1024)


# ---------------------------------------------------------------------------
# Kernel 1: node transform   xe = PReLU(x) @ W_enc_to_dec      (no bias)
#   bf16 output (f32 MXU accumulation inside, cast on store).
# ---------------------------------------------------------------------------
def node_transform_kernel(alpha_ref, x_ref, w_ref, o_ref):
    x = x_ref[...]
    xp = jnp.where(x > 0, x, alpha_ref[...] * x)          # PReLU (alpha broadcast)
    acc = jnp.dot(xp.astype(jnp.bfloat16), w_ref[...],
                  preferred_element_type=jnp.float32)
    o_ref[...] = acc.astype(o_ref.dtype)


def node_transform(alpha_row, x_pad, w_bf16, *, tile_n):
    Np, Dp = x_pad.shape
    return pl.pallas_call(
        node_transform_kernel,
        out_shape=jax.ShapeDtypeStruct((Np, Dp), jnp.bfloat16),
        grid=(Np // tile_n,),
        in_specs=[
            pl.BlockSpec((1, Dp), lambda i: (0, 0)),        # alpha row (resident)
            pl.BlockSpec((tile_n, Dp), lambda i: (i, 0)),   # x tile
            pl.BlockSpec((Dp, Dp), lambda i: (0, 0)),       # W (resident)
        ],
        out_specs=pl.BlockSpec((tile_n, Dp), lambda i: (i, 0)),
        compiler_params=pltpu.CompilerParams(
            dimension_semantics=("parallel",),
            vmem_limit_bytes=_vmem_limit_bytes()),
    )(alpha_row, x_pad, w_bf16)


# ---------------------------------------------------------------------------
# Kernel 2: fused GIN conv
#   scat  = one-hot(dst tile)   (built in-kernel from int32 dst indices)
#   aggr += scat @ msg          (scatter-add over edge tiles, f32 VMEM acc)
#   out   = ReLU(aggr @ W1 + b1) @ W2 + b2      (epilogue on last edge tile)
# ---------------------------------------------------------------------------
def gin_conv_kernel(dst_ref, msg_ref, w1_ref, b1_ref, w2_ref, b2_ref,
                    out_ref, acc_ref):
    i = pl.program_id(0)
    k = pl.program_id(1)

    @pl.when(k == 0)
    def _():
        acc_ref[...] = jnp.zeros_like(acc_ref)

    tile_n = acc_ref.shape[0]
    tile_e = dst_ref.shape[1]
    # One-hot scatter tile synthesized on the VPU.  Row r of this node tile is
    # global node id i*tile_n + r; padded edges carry dst = -1 and therefore
    # match no row (their column stays all-zero) -- invariant preserved.
    row_ids = jax.lax.broadcasted_iota(jnp.int32, (tile_n, tile_e), 0) + i * tile_n
    scat = (row_ids == dst_ref[...]).astype(jnp.bfloat16)

    acc_ref[...] += jnp.dot(scat, msg_ref[...],
                            preferred_element_type=jnp.float32)

    @pl.when(k == pl.num_programs(1) - 1)
    def _():
        aggr = acc_ref[...].astype(jnp.bfloat16)
        h1 = jnp.dot(aggr, w1_ref[...],
                     preferred_element_type=jnp.float32) + b1_ref[...]
        h1 = jnp.maximum(h1, 0.0)
        out_ref[...] = jnp.dot(h1.astype(jnp.bfloat16), w2_ref[...],
                               preferred_element_type=jnp.float32) + b2_ref[...]


def gin_conv(dst_row, msg_bf16, w1, b1, w2, b2, *, num_nodes_padded,
             tile_n, tile_e):
    Ep = dst_row.shape[1]
    Dp = msg_bf16.shape[1]
    Hp = w1.shape[1]
    Dop = w2.shape[1]
    Np = num_nodes_padded
    n_node_tiles = Np // tile_n

    flops = 2 * Np * Ep * Dp + 2 * Np * Dp * Hp + 2 * Np * Hp * Dop
    # msg and dst are re-streamed once per node tile (index_map ignores i).
    bytes_accessed = int(n_node_tiles * Ep * (Dp * 2 + 4)
                         + 2 * (w1.size + w2.size)
                         + 4 * (b1.size + b2.size)
                         + 4 * Np * Dop)

    return pl.pallas_call(
        gin_conv_kernel,
        out_shape=jax.ShapeDtypeStruct((Np, Dop), jnp.float32),
        grid=(n_node_tiles, Ep // tile_e),
        in_specs=[
            pl.BlockSpec((1, tile_e), lambda i, k: (0, k)),        # dst indices
            pl.BlockSpec((tile_e, Dp), lambda i, k: (k, 0)),       # msg tile
            pl.BlockSpec((Dp, Hp), lambda i, k: (0, 0)),           # W1 (resident)
            pl.BlockSpec((1, Hp), lambda i, k: (0, 0)),            # b1
            pl.BlockSpec((Hp, Dop), lambda i, k: (0, 0)),          # W2 (resident)
            pl.BlockSpec((1, Dop), lambda i, k: (0, 0)),           # b2
        ],
        out_specs=pl.BlockSpec((tile_n, Dop), lambda i, k: (i, 0)),
        scratch_shapes=[pltpu.VMEM((tile_n, Dp), jnp.float32)],
        compiler_params=pltpu.CompilerParams(
            dimension_semantics=("parallel", "arbitrary"),
            vmem_limit_bytes=_vmem_limit_bytes()),
        cost_estimate=pl.CostEstimate(flops=int(flops), transcendentals=0,
                                      bytes_accessed=bytes_accessed),
    )(dst_row, msg_bf16, w1, b1, w2, b2)


# ---------------------------------------------------------------------------
# Parameter init (deterministic, PyTorch-default-like; no checkpoint loading)
# ---------------------------------------------------------------------------
def _xavier(key, shape):
    fan_in, fan_out = shape
    a = float(np.sqrt(6.0 / (fan_in + fan_out)))
    return jax.random.uniform(key, shape, jnp.float32, -a, a)


def init_params(key, hidden_dim, out_dim):
    k = jax.random.split(key, 7)
    return {
        "prelu_alpha": jnp.full((1,), 0.25, jnp.float32),           # nn.PReLU()
        "w_enc_to_dec": _xavier(k[0], (hidden_dim, hidden_dim)),    # Linear no bias
        "edge_emb1": _xavier(k[1], (NUM_BOND_TYPE, hidden_dim)),
        "edge_emb2": _xavier(k[2], (NUM_BOND_DIRECTION, hidden_dim)),
        # GIN MLP: Linear(D, 2D) -> ReLU -> Linear(2D, out_dim)
        "w1": _xavier(k[3], (hidden_dim, 2 * hidden_dim)),
        "b1": jax.random.uniform(k[4], (2 * hidden_dim,), jnp.float32, -1.0, 1.0)
              / jnp.sqrt(float(hidden_dim)),
        "w2": _xavier(k[5], (2 * hidden_dim, out_dim)),
        "b2": jax.random.uniform(k[6], (out_dim,), jnp.float32, -1.0, 1.0)
              / jnp.sqrt(float(2 * hidden_dim)),
        # dec_token / temp exist on the module but are unused in forward.
        "dec_token": jnp.zeros((1, hidden_dim), jnp.float32),
    }


# ---------------------------------------------------------------------------
# Forward (gnn_type='gin')
# ---------------------------------------------------------------------------
def gnn_decoder_forward(params, x, edge_index, edge_attr, use_pallas=True,
                        tile_n=None, tile_e=None, tile_n_transform=None):
    N, D = x.shape
    H = params["w1"].shape[1]
    Dout = params["w2"].shape[1]
    E0 = edge_index.shape[1]
    E = E0 + N                                    # + self loops

    # lane-padded dims (multiple of 128)
    Dp = _round_up(D, LANE)
    Hp = _round_up(H, LANE)
    Dop = _round_up(Dout, LANE)

    n_pad_min = _round_up(N, SUBLANE)
    e_pad_min = _round_up(E, LANE)

    # gin_conv tiles: large by default (per-step overhead ~0.35us); tile_e a
    # multiple of 256 keeps the v6e/v7x 2x256^2 MXU contraction full.
    if tile_n is None:
        tile_n = min(512, n_pad_min)
        if tile_n >= n_pad_min and n_pad_min >= 2 * SUBLANE:
            # keep >=2 node tiles so the "parallel" axis feeds both v7x cores
            tile_n = _round_up((n_pad_min + 1) // 2, SUBLANE)
    if tile_e is None:
        tile_e = min(2048, e_pad_min)
    tile_n = _round_up(tile_n, SUBLANE)
    tile_e = _round_up(tile_e, LANE)
    Np = _round_up(N, tile_n)
    Ep = _round_up(E, tile_e)

    # node-transform tile: decoupled and much larger (otherwise pure overhead)
    if tile_n_transform is None:
        tile_n_transform = min(2048, n_pad_min)
    tile_n_transform = _round_up(tile_n_transform, SUBLANE)
    Npt = _round_up(N, tile_n_transform)

    # ---- padded / cast parameters (bf16 MXU operands, f32 biases) ----
    alpha_row = jnp.broadcast_to(params["prelu_alpha"].reshape(1, 1), (1, Dp)
                                 ).astype(jnp.float32)
    w_e2d = _pad2(params["w_enc_to_dec"], Dp, Dp).astype(jnp.bfloat16)
    w1 = _pad2(params["w1"], Dp, Hp).astype(jnp.bfloat16)
    b1 = _pad2(params["b1"].reshape(1, -1), 1, Hp)
    w2 = _pad2(params["w2"], Hp, Dop).astype(jnp.bfloat16)
    b2 = _pad2(params["b2"].reshape(1, -1), 1, Dop)

    # ---- padded node features (node-transform padding only) ----
    x_pad = _pad2(x, Npt, Dp)

    # ---- self loops + edge padding ----
    loop = jnp.arange(N, dtype=edge_index.dtype)
    src = jnp.concatenate([edge_index[0], loop])
    dst = jnp.concatenate([edge_index[1], loop])
    self_loop_attr = jnp.concatenate(
        [jnp.full((N, 1), 4, edge_attr.dtype),
         jnp.zeros((N, 1), edge_attr.dtype)], axis=1)
    ea = jnp.concatenate([edge_attr, self_loop_attr], axis=0)        # [E, 2]

    pad_e = Ep - E
    src_p = jnp.concatenate([src, jnp.zeros((pad_e,), src.dtype)])
    # Padded edges get dst = -1: they match no one-hot row in the kernel, so
    # their msg rows (= xe[0] + 0) contribute nothing.
    dst_p = jnp.concatenate([dst, jnp.full((pad_e,), -1, dst.dtype)])
    dst_row = dst_p.astype(jnp.int32).reshape(1, Ep)

    edge_emb = (params["edge_emb1"][ea[:, 0]]
                + params["edge_emb2"][ea[:, 1]]).astype(jnp.bfloat16)     # [E, D]
    edge_emb_p = _pad2(edge_emb, Ep, Dp)

    # ---- node transform: PReLU + enc_to_dec (bf16 out) ----
    if use_pallas:
        xe = node_transform(alpha_row, x_pad, w_e2d, tile_n=tile_n_transform)
    else:
        xp = jnp.where(x_pad > 0, x_pad, alpha_row * x_pad)
        xe = jnp.dot(xp.astype(jnp.bfloat16), w_e2d,
                     preferred_element_type=jnp.float32).astype(jnp.bfloat16)

    # message build: gather by src + edge embedding (XLA glue).
    # TODO(synk): for large graphs, replace the dense one-hot matmul with a
    # sorted-by-dst segment-sum kernel (PrefetchScalarGridSpec row offsets +
    # VPU accumulation) to eliminate the O(N*E*D) MXU work and the [Ep, Dp]
    # msg materialization / per-node-tile re-read.
    msg = xe[src_p] + edge_emb_p                                          # [Ep, Dp] bf16

    # ---- fused GIN conv ----
    if use_pallas:
        out_p = gin_conv(dst_row, msg, w1, b1, w2, b2,
                         num_nodes_padded=Np, tile_n=tile_n, tile_e=tile_e)
    else:
        scat = (dst_row == jnp.arange(Np)[:, None]).astype(jnp.bfloat16)  # [Np, Ep]
        aggr = jnp.dot(scat, msg, preferred_element_type=jnp.float32)
        h1 = jnp.maximum(jnp.dot(aggr.astype(jnp.bfloat16), w1,
                                 preferred_element_type=jnp.float32) + b1, 0.0)
        out_p = jnp.dot(h1.astype(jnp.bfloat16), w2,
                        preferred_element_type=jnp.float32) + b2

    # Padded rows of out_p contain ReLU(b1)@W2 + b2 garbage; slice them off.
    return out_p[:N, :Dout]


if __name__ == "__main__":
    key = jax.random.PRNGKey(0)
    hidden_dim = 32
    out_dim = 32
    N = 40           # nodes
    E0 = 200         # directed edges (before self loops)

    kp, kx, ks_, kd, ke1, ke2 = jax.random.split(key, 6)
    params = init_params(kp, hidden_dim, out_dim)

    x = jax.random.normal(kx, (N, hidden_dim), jnp.float32)
    edge_index = jnp.stack(
        [jax.random.randint(ks_, (E0,), 0, N, dtype=jnp.int32),
         jax.random.randint(kd, (E0,), 0, N, dtype=jnp.int32)], axis=0)  # [2, E0]
    edge_attr = jnp.stack(
        [jax.random.randint(ke1, (E0,), 0, 4, dtype=jnp.int32),
         jax.random.randint(ke2, (E0,), 0, NUM_BOND_DIRECTION, dtype=jnp.int32)],
        axis=1)                                                          # [E0, 2]

    # small tiles so the demo exercises both grid axes (3 node tiles x 2 edge tiles)
    out = gnn_decoder_forward(params, x, edge_index, edge_attr,
                              use_pallas=True, tile_n=16, tile_e=128)
    out = jax.block_until_ready(out)

    # default (large, generation-aware) tile path also runs
    out_big = gnn_decoder_forward(params, x, edge_index, edge_attr, use_pallas=True)
    out_big = jax.block_until_ready(out_big)

    ref = gnn_decoder_forward(params, x, edge_index, edge_attr, use_pallas=False)
    # bf16 MXU operands -> ~1e-3 drift vs a pure-f32 reference is intentional.
    np.testing.assert_allclose(np.asarray(out), np.asarray(ref),
                               rtol=2e-2, atol=2e-2)
    np.testing.assert_allclose(np.asarray(out_big), np.asarray(ref),
                               rtol=2e-2, atol=2e-2)

    assert out.shape == (N, out_dim)
    print("KERNEL_OK")
</pallas_src>

<mosaic_0001>
module attributes {stable_mosaic.version = 11 : i64} {
  func.func @node_transform_kernel(%arg0: i32, %arg1: memref<1x128xf32, #tpu.memory_space<vmem>>, %arg2: memref<48x128xf32, #tpu.memory_space<vmem>>, %arg3: memref<128x128xbf16, #tpu.memory_space<vmem>>, %arg4: memref<48x128xbf16, #tpu.memory_space<vmem>>) attributes {dimension_semantics = [#tpu.dimension_semantics<parallel>], iteration_bounds = array<i64: 1>, scalar_prefetch = 0 : i64, scratch_operands = 0 : i64, tpu.core_type = #tpu.core_type<tc>, window_params = [{pipeline_mode = #tpu.pipeline_mode<synchronous>, transform_indices = @transform_0, window_bounds = array<i64: 1, 128>}, {transform_indices = @transform_1, window_bounds = array<i64: 48, 128>}, {pipeline_mode = #tpu.pipeline_mode<synchronous>, transform_indices = @transform_2, window_bounds = array<i64: 128, 128>}, {transform_indices = @transform_3, window_bounds = array<i64: 48, 128>}]} {
    %c0 = arith.constant 0 : index
    %c0_0 = arith.constant 0 : index
    %0 = vector.load %arg2[%c0, %c0_0] : memref<48x128xf32, #tpu.memory_space<vmem>>, vector<48x128xf32>
    %cst = arith.constant 0.000000e+00 : f32
    %1 = vector.broadcast %cst : f32 to vector<48x128xf32>
    %2 = arith.cmpf ogt, %0, %1 : vector<48x128xf32>
    %c0_1 = arith.constant 0 : index
    %c0_2 = arith.constant 0 : index
    %3 = vector.load %arg1[%c0_1, %c0_2] : memref<1x128xf32, #tpu.memory_space<vmem>>, vector<1x128xf32>
    %4 = vector.broadcast %3 : vector<1x128xf32> to vector<48x128xf32>
    %5 = arith.mulf %4, %0 : vector<48x128xf32>
    %6 = arith.select %2, %0, %5 : vector<48x128xi1>, vector<48x128xf32>
    %7 = arith.truncf %6 : vector<48x128xf32> to vector<48x128xbf16>
    %c0_3 = arith.constant 0 : index
    %c0_4 = arith.constant 0 : index
    %8 = vector.load %arg3[%c0_3, %c0_4] : memref<128x128xbf16, #tpu.memory_space<vmem>>, vector<128x128xbf16>
    %cst_5 = arith.constant dense<0.000000e+00> : vector<48x128xf32>
    %9 = tpu.matmul %7, %8, %cst_5 {dimension_numbers = #tpu.dot_dimension_numbers<[1], [0], [0], [1], [0, 0, 1, 1], [], []>} : vector<48x128xbf16>, vector<128x128xbf16>, vector<48x128xf32> -> vector<48x128xf32>
    %10 = arith.truncf %9 : vector<48x128xf32> to vector<48x128xbf16>
    %c0_6 = arith.constant 0 : index
    %c0_7 = arith.constant 0 : index
    %11 = vector.load %arg4[%c0_6, %c0_7] : memref<48x128xbf16, #tpu.memory_space<vmem>>, vector<48x128xbf16>
    tpu.vector_store %arg4[%c0_6, %c0_7], %10 {strides = array<i32>} : memref<48x128xbf16, #tpu.memory_space<vmem>>, vector<48x128xbf16>,
    return
  }
  func.func @transform_0(%arg0: i32) -> (i32, i32) {
    %c0_i32 = arith.constant 0 : i32
    %c0_i32_0 = arith.constant 0 : i32
    %c0_i32_1 = arith.constant 0 : i32
    return %c0_i32, %c0_i32_0 : i32, i32
  }
  func.func @transform_1(%arg0: i32) -> (i32, i32) {
    %c0_i32 = arith.constant 0 : i32
    %c0_i32_0 = arith.constant 0 : i32
    return %arg0, %c0_i32 : i32, i32
  }
  func.func @transform_2(%arg0: i32) -> (i32, i32) {
    %c0_i32 = arith.constant 0 : i32
    %c0_i32_0 = arith.constant 0 : i32
    %c0_i32_1 = arith.constant 0 : i32
    return %c0_i32, %c0_i32_0 : i32, i32
  }
  func.func @transform_3(%arg0: i32) -> (i32, i32) {
    %c0_i32 = arith.constant 0 : i32
    %c0_i32_0 = arith.constant 0 : i32
    return %arg0, %c0_i32 : i32, i32
  }
}

</mosaic_0001>

<llo_original>
// kernel: tpu_custom_call.1
$region0: #{tpu_custom_call.1}
  #allocation0 [shape = 'u32[]', space=smem, size = 0x4, offset = 0x4, fixed_abs, tag = 'smem constant byte address 0x4 - core index']
  #allocation1 [shape = 'u32[72,128]{1,0:T(1,128)}', space=vmem, size = 0x9000, scoped, tag = 'internal scratch']
  %s0 = inlined_call_operand.hbm [shape: f32[1,128], index: 0, kind: input, shape index: {}]
  %s1 = inlined_call_operand.hbm [shape: f32[48,128], index: 1, kind: input, shape index: {}]
  %s2 = inlined_call_operand.hbm [shape: bf16[128,128], index: 2, kind: input, shape index: {}]
  %s3 = inlined_call_operand.hbm [shape: bf16[48,128], index: 3, kind: output, shape index: {}]
  %s4 = sld [smem:[#allocation0]]
  $region34: #{tpu_custom_call.1} parent=0
    _
  %s6 = ssub.s32 1, %s4
  %s7 = scalar_select 0, %s6, %s4
  $region1: #{tpu_custom_call.1} parent=0
    #allocation2 [shape = 'u8[512]{0}', space=vmem, size = 0x400, scoped, tag = 'input window, operand 0, single buffered']
    #allocation3 [shape = 's32[1]{0}', space=sflag, size = 0x4, scoped, tag = 'scoped memory for tpu_custom_call.1']
    #allocation4 [shape = 's32[1]{0}', space=sflag, size = 0x4, scoped, tag = 'scoped memory for tpu_custom_call.1']
    #allocation5 [shape = 'u8[24576]{0}', space=vmem, size = 0x6000, scoped, tag = 'input window, operand 1, single buffered']
    #allocation6 [shape = 's32[1]{0}', space=sflag, size = 0x4, scoped, tag = 'scoped memory for tpu_custom_call.1']
    #allocation7 [shape = 'u8[32768]{0}', space=vmem, size = 0x8000, scoped, tag = 'input window, operand 2, single buffered']
    #allocation8 [shape = 'u8[12288]{0}', space=vmem, size = 0x3000, scoped, tag = 'output window, operand 0, single buffered']
    %8 = vsyncpa [#allocation3], 0
    %9 = vsyncpa [#allocation6], 0
    %10 = vsyncpa [#allocation4], 0
    // Predicated region
    $region2: #{tpu_custom_call.1} parent=1 // pred_check
      _
    $region3: #{tpu_custom_call.1} parent=1 // pred_check_branch
      %12 = sbr.rel (0) target = $region5
    $region4: #{tpu_custom_call.1} parent=1 // pred_region
      %14 = vsyncadd [#allocation3], 0
      %s16 = sshll.u32 %s0, 4
      %s17 = int_to_ptr.hbm [resolvable:$true] %s16
      %s18 = sshll.u32 [#allocation2], 4
      %s19 = int_to_ptr.vmem [resolvable:$true] %s18
      %21 = dma.hbm_to_vmem [thread:$0]  %s17, 16, %s19, [#allocation3]
    $region5: #{tpu_custom_call.1} parent=1 // pred_fallthru
      _
    // Predicated region
    $region6: #{tpu_custom_call.1} parent=1 // pred_check
      _
    $region7: #{tpu_custom_call.1} parent=1 // pred_check_branch
      %23 = sbr.rel (0) target = $region9
    $region8: #{tpu_custom_call.1} parent=1 // pred_region
      %25 = vsyncadd [#allocation6], 0
      %s26 = sshll.u32 %s1, 4
      %s27 = int_to_ptr.hbm [resolvable:$true] %s26
      %s28 = sshll.u32 [#allocation5], 4
      %s29 = int_to_ptr.vmem [resolvable:$true] %s28
      %34 = dma.hbm_to_vmem [thread:$0]  %s27, 768, %s29, [#allocation6], 128, 128, 8
    $region9: #{tpu_custom_call.1} parent=1 // pred_fallthru
      _
    // Predicated region
    $region10: #{tpu_custom_call.1} parent=1 // pred_check
      _
    $region11: #{tpu_custom_call.1} parent=1 // pred_check_branch
      %36 = sbr.rel (0) target = $region13
    $region12: #{tpu_custom_call.1} parent=1 // pred_region
      %38 = vsyncadd [#allocation6], 0
      %s39 = sshll.u32 %s2, 4
      %s40 = int_to_ptr.hbm [resolvable:$true] %s39
      %s41 = sshll.u32 [#allocation7], 4
      %s42 = int_to_ptr.vmem [resolvable:$true] %s41
      %47 = dma.hbm_to_vmem [thread:$0]  %s40, 1024, %s42, [#allocation6], 64, 64, 4
    $region13: #{tpu_custom_call.1} parent=1 // pred_fallthru
      _
    // Predicated region
    $region14: #{tpu_custom_call.1} parent=1 // pred_check
      _
    $region15: #{tpu_custom_call.1} parent=1 // pred_check_branch
      %49 = sbr.rel (0) target = $region17
    $region16: #{tpu_custom_call.1} parent=1 // pred_region
      %51 = dma.done [#allocation3], 16
    $region17: #{tpu_custom_call.1} parent=1 // pred_fallthru
      _
    // Predicated region
    $region18: #{tpu_custom_call.1} parent=1 // pred_check
      _
    $region19: #{tpu_custom_call.1} parent=1 // pred_check_branch
      %53 = sbr.rel (0) target = $region21
    $region20: #{tpu_custom_call.1} parent=1 // pred_region
      %55 = dma.done [#allocation6], 768
    $region21: #{tpu_custom_call.1} parent=1 // pred_fallthru
      _
    // Predicated region
    $region22: #{tpu_custom_call.1} parent=1 // pred_check
      _
    $region23: #{tpu_custom_call.1} parent=1 // pred_check_branch
      %57 = sbr.rel (0) target = $region25
    $region24: #{tpu_custom_call.1} parent=1 // pred_region
      %59 = dma.done [#allocation6], 1024
    $region25: #{tpu_custom_call.1} parent=1 // pred_fallthru
      _
    %v60 = vld [vmem:[#allocation5] sm:$0xff]
    %v61 = vld [vmem:[#allocation5 + $0x8] sm:$0xff]
    %v62 = vld [vmem:[#allocation5 + $0x10] sm:$0xff]
    %v63 = vld [vmem:[#allocation5 + $0x18] sm:$0xff]
    %v64 = vld [vmem:[#allocation5 + $0x20] sm:$0xff]
    %v65 = vld [vmem:[#allocation5 + $0x28] sm:$0xff]
    %vm66 = vcmp.gt.f32.partialorder %v60, 0.0
    %vm67 = vcmp.gt.f32.partialorder %v61, 0.0
    %vm68 = vcmp.gt.f32.partialorder %v62, 0.0
    %vm69 = vcmp.gt.f32.partialorder %v63, 0.0
    %vm70 = vcmp.gt.f32.partialorder %v64, 0.0
    %vm71 = vcmp.gt.f32.partialorder %v65, 0.0
    %v72 = vld [vmem:[#allocation2] sm:$0x1]
    %v74 = vperm.slane %v72, 0
    %v76 = vmul.f32 %v74, %v60
    %v77 = vmul.f32 %v74, %v61
    %v78 = vmul.f32 %v74, %v62
    %v79 = vmul.f32 %v74, %v63
    %v80 = vmul.f32 %v74, %v64
    %v81 = vmul.f32 %v74, %v65
    %v82 = vsel %vm66, %v60, %v76
    %v83 = vsel %vm67, %v61, %v77
    %v84 = vsel %vm68, %v62, %v78
    %v85 = vsel %vm69, %v63, %v79
    %v86 = vsel %vm70, %v64, %v80
    %v87 = vsel %vm71, %v65, %v81
    %v88 = vpack.c.bf16 %v83, %v82
    %v89 = vpack.c.bf16 %v85, %v84
    %v90 = vpack.c.bf16 %v87, %v86
    %v91 = vld [vmem:[#allocation7] sm:$0xf]
    %v92 = vld [vmem:[#allocation7 + $0x4] sm:$0xf]
    %v93 = vld [vmem:[#allocation7 + $0x8] sm:$0xf]
    %v94 = vld [vmem:[#allocation7 + $0xc] sm:$0xf]
    %v95 = vld [vmem:[#allocation7 + $0x10] sm:$0xf]
    %v96 = vld [vmem:[#allocation7 + $0x14] sm:$0xf]
    %v97 = vld [vmem:[#allocation7 + $0x18] sm:$0xf]
    %v98 = vld [vmem:[#allocation7 + $0x1c] sm:$0xf]
    %v99 = vld [vmem:[#allocation7 + $0x20] sm:$0xf]
    %v100 = vld [vmem:[#allocation7 + $0x24] sm:$0xf]
    %v101 = vld [vmem:[#allocation7 + $0x28] sm:$0xf]
    %v102 = vld [vmem:[#allocation7 + $0x2c] sm:$0xf]
    %v103 = vld [vmem:[#allocation7 + $0x30] sm:$0xf]
    %v104 = vld [vmem:[#allocation7 + $0x34] sm:$0xf]
    %v105 = vld [vmem:[#allocation7 + $0x38] sm:$0xf]
    %v106 = vld [vmem:[#allocation7 + $0x3c] sm:$0xf]
    %v123 = vunpack.c.l.b16 %v91
    %v124 = vunpack.c.l.b16 %v92
    %v125 = vunpack.c.l.b16 %v93
    %v126 = vunpack.c.l.b16 %v94
    %v127 = vunpack.c.l.b16 %v95
    %v128 = vunpack.c.l.b16 %v96
    %v129 = vunpack.c.l.b16 %v97
    %v130 = vunpack.c.l.b16 %v98
    %v131 = vunpack.c.l.b16 %v99
    %v132 = vunpack.c.l.b16 %v100
    %v133 = vunpack.c.l.b16 %v101
    %v134 = vunpack.c.l.b16 %v102
    %v135 = vunpack.c.l.b16 %v103
    %v136 = vunpack.c.l.b16 %v104
    %v137 = vunpack.c.l.b16 %v105
    %v138 = vunpack.c.l.b16 %v106
    %v139 = vpack.c.b16 %v124, %v123
    %v140 = vpack.c.b16 %v126, %v125
    %v141 = vpack.c.b16 %v128, %v127
    %v142 = vpack.c.b16 %v130, %v129
    %v143 = vpack.c.b16 %v132, %v131
    %v144 = vpack.c.b16 %v134, %v133
    %v145 = vpack.c.b16 %v136, %v135
    %v146 = vpack.c.b16 %v138, %v137
    %155 = vmatpush.bf16.msra.mxu0 %v146
    %156 = vmatpush.bf16.msra.mxu0 %v145
    %157 = vmatpush.bf16.msra.mxu0 %v144
    %158 = vmatpush.bf16.msra.mxu0 %v143
    %159 = vmatpush.bf16.msra.mxu0 %v142
    %160 = vmatpush.bf16.msra.mxu0 %v141
    %161 = vmatpush.bf16.msra.mxu0 %v140
    %162 = vmatpush.bf16.msra.mxu0 %v139
    %163 = vmatmul.bf16.gmra.mxu0 %v88
    %v164 = vpop.f32.mrf.mxu0
    %v165 = vadd.f32 0.0, %v164
    %v166 = vpop.f32.mrf.mxu0
    %v167 = vadd.f32 0.0, %v166
    %168 = vmatmul.bf16.gmra.mxu0 %v89
    %v169 = vpop.f32.mrf.mxu0
    %v170 = vadd.f32 0.0, %v169
    %v171 = vpop.f32.mrf.mxu0
    %v172 = vadd.f32 0.0, %v171
    %173 = vmatmul.bf16.gmra.mxu0 %v90
    %v174 = vpop.f32.mrf.mxu0
    %v175 = vadd.f32 0.0, %v174
    %v176 = vpop.f32.mrf.mxu0
    %v177 = vadd.f32 0.0, %v176
    %178 = vdwg.mxu0
    %v179 = vpack.c.bf16 %v165, %v165
    %v180 = vpack.c.bf16 %v167, %v167
    %v181 = vpack.c.bf16 %v170, %v170
    %v182 = vpack.c.bf16 %v172, %v172
    %v183 = vpack.c.bf16 %v175, %v175
    %v184 = vpack.c.bf16 %v177, %v177
    %185 = vst [vmem:[#allocation8] sm:$0xf] %v179
    %186 = vst [vmem:[#allocation8 + $0x4] sm:$0xf] %v180
    %187 = vst [vmem:[#allocation8 + $0x8] sm:$0xf] %v181
    %188 = vst [vmem:[#allocation8 + $0xc] sm:$0xf] %v182
    %189 = vst [vmem:[#allocation8 + $0x10] sm:$0xf] %v183
    %190 = vst [vmem:[#allocation8 + $0x14] sm:$0xf] %v184
    // Predicated region
    $region26: #{tpu_custom_call.1} parent=1 // pred_check
      _
    $region27: #{tpu_custom_call.1} parent=1 // pred_check_branch
      %192 = sbr.rel (0) target = $region29
    $region28: #{tpu_custom_call.1} parent=1 // pred_region
      %194 = vsyncadd [#allocation4], 0
      %s195 = sshll.u32 [#allocation8], 4
      %s196 = int_to_ptr.vmem [resolvable:$true] %s195
      %s197 = sshll.u32 %s3, 4
      %s198 = int_to_ptr.hbm [resolvable:$true] %s197
      %203 = dma.vmem_to_hbm [thread:$0]  %s196, 384, %s198, [#allocation4], 64, 64, 4
    $region29: #{tpu_custom_call.1} parent=1 // pred_fallthru
      _
    // Predicated region
    $region30: #{tpu_custom_call.1} parent=1 // pred_check
      _
    $region31: #{tpu_custom_call.1} parent=1 // pred_check_branch
      %205 = sbr.rel (0) target = $region33
    $region32: #{tpu_custom_call.1} parent=1 // pred_region
      %207 = dma.done [#allocation4], 384
    $region33: #{tpu_custom_call.1} parent=1 // pred_fallthru
      _
    %208 = vsyncpa [#allocation3], 1
    %209 = vsyncpa [#allocation6], 1
    %210 = vsyncpa [#allocation4], 1

</llo_original>
